<compile_context>
chip_gen: v7x
topology: tpu7x:2x2x1
jax: 0.10.0
libtpu: 0.0.40
codegen_flags: <defaults>
</compile_context>

<pallas_src>
import jax
import jax.numpy as jnp
from jax.experimental import pallas as pl
from jax.experimental.pallas import tpu as pltpu


def _round_up(x, m):
    return ((x + m - 1) // m) * m


def _parallel_ffn_kernel(x_ref, w1_ref, b1_ref, w2_ref, b2sum_ref, o_ref,
                         acc_ref, xb_ref):
    """Grid = (M-tile i, branch f, H-block h).

    acc[i] += gelu(x_i @ W1[f][:, h] + b1[f][h]) @ W2[f][h, :]
    GELU is elementwise in H, so applying it per H-block is exact.
    """
    f = pl.program_id(1)
    h = pl.program_id(2)
    first = jnp.logical_and(f == 0, h == 0)
    last = jnp.logical_and(f == pl.num_programs(1) - 1,
                           h == pl.num_programs(2) - 1)

    @pl.when(first)
    def _init():
        # Cast the x tile to bf16 once per M-tile (reused for all F*H steps)
        # and zero the f32 accumulator.
        xb_ref[...] = x_ref[...].astype(jnp.bfloat16)
        acc_ref[...] = jnp.zeros_like(acc_ref)

    xb = xb_ref[...]                                                  # [tm, D] bf16
    hid = jnp.dot(xb, w1_ref[0], preferred_element_type=jnp.float32)  # [tm, th] f32
    # Bias + GELU in f32 (tanh approx, same as the JAX reference below).
    # TODO(synk): PyTorch nn.GELU defaults to exact erf; and on v6e/v7x this
    # could run in bf16 (bf16 VPU/EUP) to halve the hidden-intermediate
    # footprint — kept f32 here for v5e safety and accuracy.
    hid = jax.nn.gelu(hid + b1_ref[0])
    y = jnp.dot(hid.astype(jnp.bfloat16), w2_ref[0],
                preferred_element_type=jnp.float32)                   # [tm, D] f32
    acc_ref[...] += y                                                 # sum over f, h

    @pl.when(last)
    def _finalize():
        # Per-branch b2 adds hoisted: add sum_b b2[b] once at write-out.
        o_ref[...] = (acc_ref[...] + b2sum_ref[...]).astype(o_ref.dtype)


def _vmem_limit_bytes():
    try:
        cap = int(pltpu.get_tpu_info().vmem_capacity_bytes)
    except Exception:
        cap = 128 * 1024 * 1024
    # ~3/4 of physical VMEM, capped at 100 MiB, leaves Mosaic headroom
    # (v7x: ~48 MiB of 64; v6e/v5e: 96 MiB of 128).
    return max(32 * 1024 * 1024, min(cap * 3 // 4, 100 * 1024 * 1024))


def _vmem_footprint_bytes(tm, D, th):
    x_tile = 2 * tm * D * 4            # double-buffered f32 x tile
    xb = tm * D * 2                    # persistent bf16 x scratch
    acc = tm * D * 4                   # persistent f32 accumulator
    out = 2 * tm * D * 4               # double-buffered f32 out tile
    w1 = 2 * D * th * 2                # double-buffered bf16 W1 block
    w2 = 2 * th * D * 2                # double-buffered bf16 W2 block
    b1 = 2 * th * 4
    hid = tm * th * 4 + tm * th * 2    # f32 hidden intermediate + bf16 copy
    return x_tile + xb + acc + out + w1 + w2 + b1 + hid


def parallel_forward(x, w1, b1, w2, b2, *, tile_m=512, tile_h=None):
    """x: [B, N, D]; w1: [F, D, H]; b1: [F, 1, H]; w2: [F, H, D]; b2: [F, 1, D].

    Pass w1 / w2 already in bf16 to avoid a per-call full-HBM cast pass.
    """
    B, N, D = x.shape
    F, _, H = w1.shape
    M = B * N

    # H (reduction) tiling: keeps per-step weight blocks small (important on
    # v7x's 64 MiB VMEM) so tile_m can stay large.
    th = H if tile_h is None else min(tile_h, H)
    if th != H:
        assert H % th == 0 and th % 128 == 0, \
            "tile_h must divide H and be a multiple of 128"

    # M tiling: large M-tiles amortize the per-M-tile weight DMA
    # (intensity ~ tile_m FLOPs/byte on weight traffic).
    tm = min(tile_m, _round_up(M, 8))
    if M >= 2 * 256:
        # Keep >= 2 M-tiles so both v7x TensorCores get work on the parallel axis.
        tm = min(tm, _round_up(-(-M // 2), 8))
    vmem_limit = _vmem_limit_bytes()
    while tm > 8 and _vmem_footprint_bytes(tm, D, th) > (vmem_limit * 4) // 5:
        tm = max(8, _round_up(tm // 2, 8))
    Mp = _round_up(M, tm)

    x2 = x.reshape(M, D)
    if Mp != M:  # pad only when needed (avoids an extra HBM copy of x)
        x2 = jnp.pad(x2, ((0, Mp - M), (0, 0)))
    # NOTE: padded rows produce garbage (gelu(b1) @ W2 + b2); correctness relies
    # on the out2[:M] slice below.

    # bf16 weights for the MXU (f32 accumulation via preferred_element_type).
    # Callers should pass bf16 weights so this cast is a no-op.
    w1b = w1 if w1.dtype == jnp.bfloat16 else w1.astype(jnp.bfloat16)
    w2b = w2 if w2.dtype == jnp.bfloat16 else w2.astype(jnp.bfloat16)
    b1f = b1.astype(jnp.float32)
    b2sum = jnp.sum(b2.astype(jnp.float32), axis=0)                   # [1, D]

    n_m_tiles = Mp // tm
    flops = 4 * F * Mp * D * H                                        # 2 matmuls
    bytes_accessed = (
        Mp * D * x2.dtype.itemsize                                    # x read (amortized over f, h)
        + n_m_tiles * (w1b.size * w1b.dtype.itemsize
                       + w2b.size * w2b.dtype.itemsize)               # weights re-fetched per M-tile
        + n_m_tiles * F * H * 4 + D * 4                               # b1, b2sum
        + Mp * D * x.dtype.itemsize)                                  # out write
    cost = pl.CostEstimate(flops=flops, transcendentals=F * Mp * H,
                           bytes_accessed=bytes_accessed)

    out2 = pl.pallas_call(
        _parallel_ffn_kernel,
        out_shape=jax.ShapeDtypeStruct((Mp, D), x.dtype),
        grid_spec=pltpu.PrefetchScalarGridSpec(
            num_scalar_prefetch=0,
            grid=(n_m_tiles, F, H // th),       # (parallel, reduction, reduction)
            in_specs=[
                pl.BlockSpec((tm, D),    lambda i, f, h: (i, 0)),     # x tile
                pl.BlockSpec((1, D, th), lambda i, f, h: (f, 0, h)),  # W1[f][:, h]
                pl.BlockSpec((1, 1, th), lambda i, f, h: (f, 0, h)),  # b1[f][h]
                pl.BlockSpec((1, th, D), lambda i, f, h: (f, h, 0)),  # W2[f][h, :]
                pl.BlockSpec((1, D),     lambda i, f, h: (0, 0)),     # sum_b b2[b]
            ],
            out_specs=pl.BlockSpec((tm, D), lambda i, f, h: (i, 0)),
            scratch_shapes=[pltpu.VMEM((tm, D), jnp.float32),         # f32 accumulator
                            pltpu.VMEM((tm, D), jnp.bfloat16)],       # bf16 x cache
        ),
        compiler_params=pltpu.CompilerParams(
            dimension_semantics=("parallel", "arbitrary", "arbitrary"),
            vmem_limit_bytes=vmem_limit),
        cost_estimate=cost,
    )(x2, w1b, b1f, w2b, b2sum)

    return out2[:M].reshape(B, N, D)
    # TODO(synk): output could be emitted in bf16 (halves writeback DMA) once
    # downstream consumers accept it.


def parallel_reference(x, w1, b1, w2, b2):
    """Pure-JAX f32 reference:  sum over branches of FFN(x)."""
    F = w1.shape[0]
    outs = []
    for b in range(F):
        h = jax.nn.gelu(x @ w1[b] + b1[b][0])
        outs.append(h @ w2[b] + b2[b][0])
    return sum(outs)


if __name__ == "__main__":
    key = jax.random.PRNGKey(0)
    # Small but lane-dense shapes: M = B*N = 128 (one M-tile), D, H multiples of 128.
    B, N, D, H, F = 2, 64, 128, 256, 2

    kx, k1, k2, k3, k4 = jax.random.split(key, 5)
    x = jax.random.normal(kx, (B, N, D), dtype=jnp.float32)
    w1 = jax.random.normal(k1, (F, D, H), dtype=jnp.float32) * (1.0 / D ** 0.5)
    b1 = jax.random.normal(k2, (F, 1, H), dtype=jnp.float32) * 0.01
    w2 = jax.random.normal(k3, (F, H, D), dtype=jnp.float32) * (1.0 / H ** 0.5)
    b2 = jax.random.normal(k4, (F, 1, D), dtype=jnp.float32) * 0.01

    # Weight bf16 casts hoisted out of the forward (done once, not per call).
    w1b = w1.astype(jnp.bfloat16)
    w2b = w2.astype(jnp.bfloat16)

    out = parallel_forward(x, w1b, b1, w2b, b2, tile_h=128)  # exercises the H axis
    out = jax.block_until_ready(out)

    ref = parallel_reference(x, w1, b1, w2, b2)
    assert out.shape == (B, N, D)
    # bf16 matmul operands vs f32 reference -> loosened tolerance (expected rounding).
    assert jnp.allclose(out, ref, atol=5e-2, rtol=5e-2), "mismatch vs reference"
    print("KERNEL_OK")
</pallas_src>

<mosaic_0001>
module attributes {stable_mosaic.version = 11 : i64} {
  func.func @_parallel_ffn_kernel(%arg0: i32, %arg1: i32, %arg2: i32, %arg3: memref<128x128xf32, #tpu.memory_space<vmem>>, %arg4: memref<1x128x128xbf16, #tpu.memory_space<vmem>>, %arg5: memref<1x1x128xf32, #tpu.memory_space<vmem>>, %arg6: memref<1x128x128xbf16, #tpu.memory_space<vmem>>, %arg7: memref<1x128xf32, #tpu.memory_space<vmem>>, %arg8: memref<128x128xf32, #tpu.memory_space<vmem>>, %arg9: memref<128x128xf32, #tpu.memory_space<vmem>>, %arg10: memref<128x128xbf16, #tpu.memory_space<vmem>>) attributes {dimension_semantics = [#tpu.dimension_semantics<parallel>, #tpu.dimension_semantics<arbitrary>, #tpu.dimension_semantics<arbitrary>], iteration_bounds = array<i64: 1, 2, 2>, scalar_prefetch = 0 : i64, scratch_operands = 2 : i64, tpu.core_type = #tpu.core_type<tc>, window_params = [{transform_indices = @transform_0, window_bounds = array<i64: 128, 128>}, {transform_indices = @transform_1, window_bounds = array<i64: 1, 128, 128>}, {transform_indices = @transform_2, window_bounds = array<i64: 1, 1, 128>}, {transform_indices = @transform_3, window_bounds = array<i64: 1, 128, 128>}, {pipeline_mode = #tpu.pipeline_mode<synchronous>, transform_indices = @transform_4, window_bounds = array<i64: 1, 128>}, {transform_indices = @transform_5, window_bounds = array<i64: 128, 128>}]} {
    %c0_i32 = arith.constant 0 : i32
    %0 = arith.cmpi eq, %arg1, %c0_i32 : i32
    %c0_i32_0 = arith.constant 0 : i32
    %1 = arith.cmpi eq, %arg2, %c0_i32_0 : i32
    %2 = arith.andi %0, %1 : i1
    %c1_i32 = arith.constant 1 : i32
    %3 = arith.cmpi eq, %arg1, %c1_i32 : i32
    %c1_i32_1 = arith.constant 1 : i32
    %4 = arith.cmpi eq, %arg2, %c1_i32_1 : i32
    %5 = arith.andi %3, %4 : i1
    %6 = arith.extui %2 : i1 to i32
    %c0_i32_2 = arith.constant 0 : i32
    %7 = arith.cmpi ne, %6, %c0_i32_2 : i32
    scf.if %7 {
      %c0_23 = arith.constant 0 : index
      %c0_24 = arith.constant 0 : index
      %38 = vector.load %arg3[%c0_23, %c0_24] : memref<128x128xf32, #tpu.memory_space<vmem>>, vector<128x128xf32>
      %39 = arith.truncf %38 : vector<128x128xf32> to vector<128x128xbf16>
      %c0_25 = arith.constant 0 : index
      %c0_26 = arith.constant 0 : index
      %40 = vector.load %arg10[%c0_25, %c0_26] : memref<128x128xbf16, #tpu.memory_space<vmem>>, vector<128x128xbf16>
      tpu.vector_store %arg10[%c0_25, %c0_26], %39 {strides = array<i32>} : memref<128x128xbf16, #tpu.memory_space<vmem>>, vector<128x128xbf16>,
      %cst_27 = arith.constant 0.000000e+00 : f32
      %41 = vector.broadcast %cst_27 : f32 to vector<128x128xf32>
      %c0_28 = arith.constant 0 : index
      %c0_29 = arith.constant 0 : index
      %42 = vector.load %arg9[%c0_28, %c0_29] : memref<128x128xf32, #tpu.memory_space<vmem>>, vector<128x128xf32>
      tpu.vector_store %arg9[%c0_28, %c0_29], %41 {strides = array<i32>} : memref<128x128xf32, #tpu.memory_space<vmem>>, vector<128x128xf32>,
    } else {
    }
    %c0 = arith.constant 0 : index
    %c0_3 = arith.constant 0 : index
    %8 = vector.load %arg10[%c0, %c0_3] : memref<128x128xbf16, #tpu.memory_space<vmem>>, vector<128x128xbf16>
    %c0_4 = arith.constant 0 : index
    %c0_5 = arith.constant 0 : index
    %c0_6 = arith.constant 0 : index
    %9 = vector.load %arg4[%c0_4, %c0_5, %c0_6] : memref<1x128x128xbf16, #tpu.memory_space<vmem>>, vector<1x128x128xbf16>
    %10 = vector.shape_cast %9 : vector<1x128x128xbf16> to vector<128x128xbf16>
    %cst = arith.constant dense<0.000000e+00> : vector<128x128xf32>
    %11 = tpu.matmul %8, %10, %cst {dimension_numbers = #tpu.dot_dimension_numbers<[1], [0], [0], [1], [0, 0, 1, 1], [], []>} : vector<128x128xbf16>, vector<128x128xbf16>, vector<128x128xf32> -> vector<128x128xf32>
    %c0_7 = arith.constant 0 : index
    %c0_8 = arith.constant 0 : index
    %c0_9 = arith.constant 0 : index
    %12 = vector.load %arg5[%c0_7, %c0_8, %c0_9] : memref<1x1x128xf32, #tpu.memory_space<vmem>>, vector<1x1x128xf32>
    %13 = vector.shape_cast %12 : vector<1x1x128xf32> to vector<1x128xf32>
    %14 = vector.broadcast %13 : vector<1x128xf32> to vector<128x128xf32>
    %15 = arith.addf %11, %14 : vector<128x128xf32>
    %16 = arith.mulf %15, %15 : vector<128x128xf32>
    %17 = arith.mulf %15, %16 : vector<128x128xf32>
    %cst_10 = arith.constant 4.471500e-02 : f32
    %18 = vector.broadcast %cst_10 : f32 to vector<128x128xf32>
    %19 = arith.mulf %18, %17 : vector<128x128xf32>
    %20 = arith.addf %15, %19 : vector<128x128xf32>
    %cst_11 = arith.constant 0.797884583 : f32
    %21 = vector.broadcast %cst_11 : f32 to vector<128x128xf32>
    %22 = arith.mulf %21, %20 : vector<128x128xf32>
    %23 = math.tanh %22 : vector<128x128xf32>
    %cst_12 = arith.constant 1.000000e+00 : f32
    %24 = vector.broadcast %cst_12 : f32 to vector<128x128xf32>
    %25 = arith.addf %24, %23 : vector<128x128xf32>
    %cst_13 = arith.constant 5.000000e-01 : f32
    %26 = vector.broadcast %cst_13 : f32 to vector<128x128xf32>
    %27 = arith.mulf %26, %25 : vector<128x128xf32>
    %28 = arith.mulf %15, %27 : vector<128x128xf32>
    %29 = arith.truncf %28 : vector<128x128xf32> to vector<128x128xbf16>
    %c0_14 = arith.constant 0 : index
    %c0_15 = arith.constant 0 : index
    %c0_16 = arith.constant 0 : index
    %30 = vector.load %arg6[%c0_14, %c0_15, %c0_16] : memref<1x128x128xbf16, #tpu.memory_space<vmem>>, vector<1x128x128xbf16>
    %31 = vector.shape_cast %30 : vector<1x128x128xbf16> to vector<128x128xbf16>
    %cst_17 = arith.constant dense<0.000000e+00> : vector<128x128xf32>
    %32 = tpu.matmul %29, %31, %cst_17 {dimension_numbers = #tpu.dot_dimension_numbers<[1], [0], [0], [1], [0, 0, 1, 1], [], []>} : vector<128x128xbf16>, vector<128x128xbf16>, vector<128x128xf32> -> vector<128x128xf32>
    %c0_18 = arith.constant 0 : index
    %c0_19 = arith.constant 0 : index
    %33 = vector.load %arg9[%c0_18, %c0_19] : memref<128x128xf32, #tpu.memory_space<vmem>>, vector<128x128xf32>
    %34 = arith.addf %33, %32 : vector<128x128xf32>
    %c0_20 = arith.constant 0 : index
    %c0_21 = arith.constant 0 : index
    %35 = vector.load %arg9[%c0_20, %c0_21] : memref<128x128xf32, #tpu.memory_space<vmem>>, vector<128x128xf32>
    tpu.vector_store %arg9[%c0_20, %c0_21], %34 {strides = array<i32>} : memref<128x128xf32, #tpu.memory_space<vmem>>, vector<128x128xf32>,
    %36 = arith.extui %5 : i1 to i32
    %c0_i32_22 = arith.constant 0 : i32
    %37 = arith.cmpi ne, %36, %c0_i32_22 : i32
    scf.if %37 {
      %c0_23 = arith.constant 0 : index
      %c0_24 = arith.constant 0 : index
      %38 = vector.load %arg9[%c0_23, %c0_24] : memref<128x128xf32, #tpu.memory_space<vmem>>, vector<128x128xf32>
      %c0_25 = arith.constant 0 : index
      %c0_26 = arith.constant 0 : index
      %39 = vector.load %arg7[%c0_25, %c0_26] : memref<1x128xf32, #tpu.memory_space<vmem>>, vector<1x128xf32>
      %40 = vector.broadcast %39 : vector<1x128xf32> to vector<128x128xf32>
      %41 = arith.addf %38, %40 : vector<128x128xf32>
      %c0_27 = arith.constant 0 : index
      %c0_28 = arith.constant 0 : index
      %42 = vector.load %arg8[%c0_27, %c0_28] : memref<128x128xf32, #tpu.memory_space<vmem>>, vector<128x128xf32>
      tpu.vector_store %arg8[%c0_27, %c0_28], %41 {strides = array<i32>} : memref<128x128xf32, #tpu.memory_space<vmem>>, vector<128x128xf32>,
    } else {
    }
    return
  }
  func.func @transform_0(%arg0: i32, %arg1: i32, %arg2: i32) -> (i32, i32) {
    %c0_i32 = arith.constant 0 : i32
    %c0_i32_0 = arith.constant 0 : i32
    return %arg0, %c0_i32 : i32, i32
  }
  func.func @transform_1(%arg0: i32, %arg1: i32, %arg2: i32) -> (i32, i32, i32) {
    %c0_i32 = arith.constant 0 : i32
    %c0_i32_0 = arith.constant 0 : i32
    return %arg1, %c0_i32, %arg2 : i32, i32, i32
  }
  func.func @transform_2(%arg0: i32, %arg1: i32, %arg2: i32) -> (i32, i32, i32) {
    %c0_i32 = arith.constant 0 : i32
    %c0_i32_0 = arith.constant 0 : i32
    return %arg1, %c0_i32, %arg2 : i32, i32, i32
  }
  func.func @transform_3(%arg0: i32, %arg1: i32, %arg2: i32) -> (i32, i32, i32) {
    %c0_i32 = arith.constant 0 : i32
    %c0_i32_0 = arith.constant 0 : i32
    return %arg1, %arg2, %c0_i32 : i32, i32, i32
  }
  func.func @transform_4(%arg0: i32, %arg1: i32, %arg2: i32) -> (i32, i32) {
    %c0_i32 = arith.constant 0 : i32
    %c0_i32_0 = arith.constant 0 : i32
    %c0_i32_1 = arith.constant 0 : i32
    return %c0_i32, %c0_i32_0 : i32, i32
  }
  func.func @transform_5(%arg0: i32, %arg1: i32, %arg2: i32) -> (i32, i32) {
    %c0_i32 = arith.constant 0 : i32
    %c0_i32_0 = arith.constant 0 : i32
    return %arg0, %c0_i32 : i32, i32
  }
}

</mosaic_0001>

<llo_original>
// kernel: tpu_custom_call.1
$region0: #{tpu_custom_call.1}
  #allocation0 [shape = 'u32[]', space=smem, size = 0x4, offset = 0x4, fixed_abs, tag = 'smem constant byte address 0x4 - core index']
  #allocation1 [shape = 'u32[144,128]{1,0:T(1,128)}', space=vmem, size = 0x12000, scoped, tag = 'internal scratch']
  #allocation2 [shape = 'f32[128,128]{1,0:T(8,128)}', space=vmem, size = 0x10000, scoped, tag = 'scratch operand']
  #allocation3 [shape = 'bf16[128,128]{1,0:T(16,128)(2,1)}', space=vmem, size = 0x8000, scoped, tag = 'scratch operand']
  %s0 = inlined_call_operand.hbm [shape: f32[128,128], index: 0, kind: input, shape index: {}]
  %s1 = inlined_call_operand.hbm [shape: bf16[2,128,256], index: 1, kind: input, shape index: {}]
  %s2 = inlined_call_operand.hbm [shape: f32[2,1,256], index: 2, kind: input, shape index: {}]
  %s3 = inlined_call_operand.hbm [shape: bf16[2,256,128], index: 3, kind: input, shape index: {}]
  %s4 = inlined_call_operand.hbm [shape: f32[1,128], index: 4, kind: input, shape index: {}]
  %s5 = inlined_call_operand.hbm [shape: f32[128,128], index: 5, kind: output, shape index: {}]
  %s6 = sld [smem:[#allocation0]]
  $region81: #{tpu_custom_call.1} parent=0
    _
  %s8 = ssub.s32 1, %s6
  %s9 = scalar_select 0, %s8, %s6
  $region1: #{tpu_custom_call.1} parent=0
    #allocation4 [shape = 'u8[65536]{0}', space=vmem, size = 0x10000, scoped, tag = 'input window, operand 0, single buffered']
    #allocation5 [shape = 's32[2]{0}', space=sflag, size = 0x8, scoped, tag = 'scoped memory for tpu_custom_call.1']
    #allocation6 [shape = 's32[2]{0}', space=sflag, size = 0x8, scoped, tag = 'scoped memory for tpu_custom_call.1']
    #allocation7 [shape = 'u8[65536]{0}', space=vmem, size = 0x10000, scoped, tag = 'input window, operand 1']
    #allocation8 [shape = 's32[2]{0}', space=sflag, size = 0x8, scoped, tag = 'scoped memory for tpu_custom_call.1']
    #allocation9 [shape = 'u8[1024]{0}', space=vmem, size = 0x400, scoped, tag = 'input window, operand 2']
    #allocation10 [shape = 'u8[65536]{0}', space=vmem, size = 0x10000, scoped, tag = 'input window, operand 3']
    #allocation11 [shape = 's32[2]{0}', space=sflag, size = 0x8, scoped, tag = 'scoped memory for tpu_custom_call.1']
    #allocation12 [shape = 'u8[512]{0}', space=vmem, size = 0x400, scoped, tag = 'input window, operand 4, single buffered']
    #allocation13 [shape = 'u8[65536]{0}', space=vmem, size = 0x10000, scoped, tag = 'output window, operand 0, single buffered']
    %10 = vsyncpa [#allocation5], 0
    %11 = vsyncpa [#allocation8], 0
    %s12 = scalar_lea.sflag [#allocation8], 1
    %13 = vsyncpa %s12, 0
    %14 = vsyncpa [#allocation11], 0
    %s15 = scalar_lea.sflag [#allocation11], 1
    %16 = vsyncpa %s15, 0
    %17 = vsyncpa [#allocation6], 0
    loop: start=0, step=1, limit=6
    $region2: #{tpu_custom_call.1} parent=1 // loop_pre_header
      _
    $region3: #{tpu_custom_call.1} parent=1 // loop_header
      %s19 = sphi 0, %s23
      %p20 = scmp.ge.s32.totalorder %s19, 6
      %s26 = sphi 0, %s45
      %s27 = sphi 0, %s41
      %s28 = sphi 0, %s37
      %s29 = sphi 0, %s26
      %s30 = sphi 0, %s27
      %s31 = sphi 0, %s28
      %s32 = sphi 0, %s29
      %s33 = sphi 0, %s30
      %s34 = sphi 0, %s31
      %s48 = sphi 0, %s50
      %s51 = sphi 0, %s48
      %s52 = sphi 0, %s51
      %s68 = sphi 0, %s52
      %s76 = sphi 0, %s78
      %s79 = sphi 0, %s76
      %s80 = sphi 0, %s79
      %s96 = sphi 0, %s80
      %s104 = sphi 0, %s106
      %s107 = sphi 0, %s104
      %s108 = sphi 0, %s107
      %s124 = sphi 0, %s108
      %s132 = sphi 0, %s134
      %s135 = sphi 0, %s132
      %s136 = sphi 0, %s135
      %s152 = sphi 0, %s136
      %s156 = sphi 0, %s156
      %s158 = sphi 0, %s156
      %s159 = sphi 0, %s158
      %s173 = sphi 0, %s159
      %s179 = sphi 0, %s181
      %s182 = sphi 0, %s179
      %s183 = sphi 0, %s182
      %s199 = sphi 0, %s183
    $region4: #{tpu_custom_call.1} parent=1 // loop_header_branch
      %22 = sbr.rel (%p20) target = $region8
    $region5: #{tpu_custom_call.1} parent=1 // loop_body
      %s24 = ssub.s32 %s19, 1
      %s25 = ssub.s32 %s19, 2
      %s35 = sadd.s32 1, %s28
      %p36 = scmp.ge.s32.totalorder %s35, 2
      %s37 = scalar_select %p36, 0, %s35
      %s38 = sadd.s32 1, %s27
      %s39 = scalar_select %p36, %s38, %s27
      %p40 = scmp.ge.s32.totalorder %s39, 2
      %s41 = scalar_select %p40, 0, %s39
      %s42 = sadd.s32 1, %s26
      %s43 = scalar_select %p40, %s42, %s26
      %p44 = scmp.ge.s32.totalorder %s43, 1
      %s45 = scalar_select %p44, 0, %s43
      %s46 = ssub.s32 %s26, %s45
      %p47 = scmp.eq.s32.totalorder %s46, 0
      %s49 = sadd.s32 %s48, 1
      %s50 = scalar_select %p47, %s48, %s49
      %p53 = pneg %p47
      %p54 = scmp.eq.s32.totalorder %s19, 3
      %p55 = por %p53, %p54
      %p56 = scmp.ne.s32.totalorder %s48, %s51
      %p57 = scmp.eq.s32.totalorder %s19, 0
      %p58 = por %p56, %p57
      %p59 = scmp.ne.s32.totalorder %s48, %s51
      %p60 = scmp.eq.s32.totalorder %s24, 3
      %p61 = por %p59, %p60
      %p62 = scmp.ne.s32.totalorder %s51, %s52
      %p63 = scmp.eq.s32.totalorder %s24, 0
      %p64 = por %p62, %p63
      %p65 = scmp.ne.s32.totalorder %s51, %s52
      %p66 = scmp.eq.s32.totalorder %s25, 3
      %p67 = por %p65, %p66
      %p69 = scmp.ne.s32.totalorder %s52, %s68
      %p70 = scmp.eq.s32.totalorder %s25, 0
      %p71 = por %p69, %p70
      %s72 = ssub.s32 %s27, %s41
      %s73 = ssub.s32 %s28, %s37
      %s74 = sor.u32 %s72, %s73
      %p75 = scmp.eq.s32.totalorder %s74, 0
      %s77 = sadd.s32 %s76, 1
      %s78 = scalar_select %p75, %s76, %s77
      %p81 = pneg %p75
      %p82 = scmp.eq.s32.totalorder %s19, 3
      %p83 = por %p81, %p82
      %p84 = scmp.ne.s32.totalorder %s76, %s79
      %p85 = scmp.eq.s32.totalorder %s19, 0
      %p86 = por %p84, %p85
      %p87 = scmp.ne.s32.totalorder %s76, %s79
      %p88 = scmp.eq.s32.totalorder %s24, 3
      %p89 = por %p87, %p88
      %p90 = scmp.ne.s32.totalorder %s79, %s80
      %p91 = scmp.eq.s32.totalorder %s24, 0
      %p92 = por %p90, %p91
      %p93 = scmp.ne.s32.totalorder %s79, %s80
      %p94 = scmp.eq.s32.totalorder %s25, 3
      %p95 = por %p93, %p94
      %p97 = scmp.ne.s32.totalorder %s80, %s96
      %p98 = scmp.eq.s32.totalorder %s25, 0
      %p99 = por %p97, %p98
      %s100 = ssub.s32 %s27, %s41
      %s101 = ssub.s32 %s28, %s37
      %s102 = sor.u32 %s100, %s101
      %p103 = scmp.eq.s32.totalorder %s102, 0
      %s105 = sadd.s32 %s104, 1
      %s106 = scalar_select %p103, %s104, %s105
      %p109 = pneg %p103
      %p110 = scmp.eq.s32.totalorder %s19, 3
      %p111 = por %p109, %p110
      %p112 = scmp.ne.s32.totalorder %s104, %s107
      %p113 = scmp.eq.s32.totalorder %s19, 0
      %p114 = por %p112, %p113
      %p115 = scmp.ne.s32.totalorder %s104, %s107
      %p116 = scmp.eq.s32.totalorder %s24, 3
      %p117 = por %p115, %p116
      %p118 = scmp.ne.s32.totalorder %s107, %s108
      %p119 = scmp.eq.s32.totalorder %s24, 0
      %p120 = por %p118, %p119
      %p121 = scmp.ne.s32.totalorder %s107, %s108
      %p122 = scmp.eq.s32.totalorder %s25, 3
      %p123 = por %p121, %p122
      %p125 = scmp.ne.s32.totalorder %s108, %s124
      %p126 = scmp.eq.s32.totalorder %s25, 0
      %p127 = por %p125, %p126
      %s128 = ssub.s32 %s27, %s41
      %s129 = ssub.s32 %s28, %s37
      %s130 = sor.u32 %s128, %s129
      %p131 = scmp.eq.s32.totalorder %s130, 0
      %s133 = sadd.s32 %s132, 1
      %s134 = scalar_select %p131, %s132, %s133
      %p137 = pneg %p131
      %p138 = scmp.eq.s32.totalorder %s19, 3
      %p139 = por %p137, %p138
      %p140 = scmp.ne.s32.totalorder %s132, %s135
      %p141 = scmp.eq.s32.totalorder %s19, 0
      %p142 = por %p140, %p141
      %p143 = scmp.ne.s32.totalorder %s132, %s135
      %p144 = scmp.eq.s32.totalorder %s24, 3
      %p145 = por %p143, %p144
      %p146 = scmp.ne.s32.totalorder %s135, %s136
      %p147 = scmp.eq.s32.totalorder %s24, 0
      %p148 = por %p146, %p147
      %p149 = scmp.ne.s32.totalorder %s135, %s136
      %p150 = scmp.eq.s32.totalorder %s25, 3
      %p151 = por %p149, %p150
      %p153 = scmp.ne.s32.totalorder %s136, %s152
      %p154 = scmp.eq.s32.totalorder %s25, 0
      %p155 = por %p153, %p154
      %s157 = sadd.s32 %s156, 1
      %p160 = scmp.eq.s32.totalorder %s19, 3
      %p161 = scmp.ne.s32.totalorder %s156, %s158
      %p162 = scmp.eq.s32.totalorder %s19, 0
      %p163 = por %p161, %p162
      %p164 = scmp.ne.s32.totalorder %s156, %s158
      %p165 = scmp.eq.s32.totalorder %s24, 3
      %p166 = por %p164, %p165
      %p167 = scmp.ne.s32.totalorder %s158, %s159
      %p168 = scmp.eq.s32.totalorder %s24, 0
      %p169 = por %p167, %p168
      %p170 = scmp.ne.s32.totalorder %s158, %s159
      %p171 = scmp.eq.s32.totalorder %s25, 3
      %p172 = por %p170, %p171
      %p174 = scmp.ne.s32.totalorder %s159, %s173
      %p175 = scmp.eq.s32.totalorder %s25, 0
      %p176 = por %p174, %p175
      %s177 = ssub.s32 %s26, %s45
      %p178 = scmp.eq.s32.totalorder %s177, 0
      %s180 = sadd.s32 %s179, 1
      %s181 = scalar_select %p178, %s179, %s180
      %p184 = pneg %p178
      %p185 = scmp.eq.s32.totalorder %s19, 3
      %p186 = por %p184, %p185
      %p187 = scmp.ne.s32.totalorder %s179, %s182
      %p188 = scmp.eq.s32.totalorder %s19, 0
      %p189 = por %p187, %p188
      %p190 = scmp.ne.s32.totalorder %s179, %s182
      %p191 = scmp.eq.s32.totalorder %s24, 3
      %p192 = por %p190, %p191
      %p193 = scmp.ne.s32.totalorder %s182, %s183
      %p194 = scmp.eq.s32.totalorder %s24, 0
      %p195 = por %p193, %p194
      %p196 = scmp.ne.s32.totalorder %s182, %s183
      %p197 = scmp.eq.s32.totalorder %s25, 3
      %p198 = por %p196, %p197
      %p200 = scmp.ne.s32.totalorder %s183, %s199
      %p201 = scmp.eq.s32.totalorder %s25, 0
      %p202 = por %p200, %p201
      %p203 = scmp.le.s32.totalorder 1, %s19
      %p204 = scmp.lt.s32.totalorder %s19, 5
      %p205 = pnand %p203, %p204
      %p206 = pneg %p205
      // Predicated region
      $region9: #{tpu_custom_call.1} parent=5 // pred_check
        _
      $region10: #{tpu_custom_call.1} parent=5 // pred_check_branch
        %208 = sbr.rel (%p205) target = $region12
      $region11: #{tpu_custom_call.1} parent=5 // pred_region
        %s209 = ssub.s32 %s19, 1
        // Predicated region
        $region13: #{tpu_custom_call.1} parent=11 // pred_check
          %p210 = pneg %p64
        $region14: #{tpu_custom_call.1} parent=11 // pred_check_branch
          %212 = sbr.rel (%p210) target = $region16
        $region15: #{tpu_custom_call.1} parent=11 // pred_region
          %s213 = smul.u32 16, %s29
          %s215 = ssub.s32 2048, 2048
          %216 = vsyncadd [#allocation5], %s215
          %s217 = smul.addr %s213, 128
          %s218 = scalar_lea.hbm %s0, %s217
          %s219 = sshll.u32 [#allocation4], 4
          %s220 = int_to_ptr.vmem [resolvable:$true] %s219
          %225 = dma.hbm_to_vmem [thread:$0]  %s218, 2048, %s220, [#allocation5], 128, 128, 8
        $region16: #{tpu_custom_call.1} parent=11 // pred_fallthru
          _
        // Predicated region
        $region17: #{tpu_custom_call.1} parent=11 // pred_check
          %p226 = pneg %p169
        $region18: #{tpu_custom_call.1} parent=11 // pred_check_branch
          %228 = sbr.rel (%p226) target = $region20
        $region19: #{tpu_custom_call.1} parent=11 // pred_region
          %s230 = ssub.s32 16, 16
          %231 = vsyncadd [#allocation11], %s230
          %s233 = sshll.u32 [#allocation12], 4
          %s234 = int_to_ptr.vmem [resolvable:$true] %s233
          %236 = dma.hbm_to_vmem [thread:$0]  %s4, 16, %s234, [#allocation11]
        $region20: #{tpu_custom_call.1} parent=11 // pred_fallthru
          _
      $region12: #{tpu_custom_call.1} parent=5 // pred_fallthru
        _
      %p237 = scmp.lt.s32.totalorder %s19, 4
      // Predicated region
      $region21: #{tpu_custom_call.1} parent=5 // pred_check
        %p238 = pneg %p237
      $region22: #{tpu_custom_call.1} parent=5 // pred_check_branch
        %240 = sbr.rel (%p238) target = $region24
      $region23: #{tpu_custom_call.1} parent=5 // pred_region
        // Predicated region
        $region25: #{tpu_custom_call.1} parent=23 // pred_check
          %p241 = pneg %p86
        $region26: #{tpu_custom_call.1} parent=23 // pred_check_branch
          %243 = sbr.rel (%p241) target = $region28
        $region27: #{tpu_custom_call.1} parent=23 // pred_region
          %s244 = sand.u32 %s19, 1
          %s245 = scalar_lea.sflag [#allocation8], %s244
          %s246 = sand.u32 %s76, 1
          %s247 = smul.addr %s246, 64
          %s248 = scalar_lea.vmem [#allocation7], %s247
          %s250 = ssub.s32 1024, 1024
          %251 = vsyncadd %s245, %s250
          %s252 = smul.addr %s27, 32
          %s253 = sadd.s32 %s28, %s252
          %s254 = smul.addr %s253, 64
          %s255 = scalar_lea.hbm %s1, %s254
          %s256 = sshll.u32 %s248, 4
          %s257 = int_to_ptr.vmem [resolvable:$true] %s256
          %262 = dma.hbm_to_vmem [thread:$0]  %s255, 1024, %s257, %s245, 128, 64, 4
        $region28: #{tpu_custom_call.1} parent=23 // pred_fallthru
          _
        // Predicated region
        $region29: #{tpu_custom_call.1} parent=23 // pred_check
          %p263 = pneg %p114
        $region30: #{tpu_custom_call.1} parent=23 // pred_check_branch
          %265 = sbr.rel (%p263) target = $region32
        $region31: #{tpu_custom_call.1} parent=23 // pred_region
          %s266 = sand.u32 %s19, 1
          %s267 = scalar_lea.sflag [#allocation8], %s266
          %s268 = sand.u32 %s104, 1
          %s269 = scalar_lea.vmem [#allocation9], %s268
          %s271 = ssub.s32 16, 16
          %272 = vsyncadd %s267, %s271
          %s273 = smul.addr %s27, 2
          %s274 = sadd.s32 %s28, %s273
          %s275 = smul.addr %s274, 16
          %s276 = scalar_lea.hbm %s2, %s275
          %s278 = sshll.u32 %s269, 4
          %s279 = int_to_ptr.vmem [resolvable:$true] %s278
          %281 = dma.hbm_to_vmem [thread:$0]  %s276, 16, %s279, %s267
        $region32: #{tpu_custom_call.1} parent=23 // pred_fallthru
          _
        // Predicated region
        $region33: #{tpu_custom_call.1} parent=23 // pred_check
          %p282 = pneg %p142
        $region34: #{tpu_custom_call.1} parent=23 // pred_check_branch
          %284 = sbr.rel (%p282) target = $region36
        $region35: #{tpu_custom_call.1} parent=23 // pred_region
          %s285 = sand.u32 %s19, 1
          %s286 = scalar_lea.sflag [#allocation11], %s285
          %s287 = sand.u32 %s132, 1
          %s288 = smul.addr %s287, 64
          %s289 = scalar_lea.vmem [#allocation10], %s288
          %s290 = smul.u32 16, %s28
          %s292 = ssub.s32 1024, 1024
          %293 = vsyncadd %s286, %s292
          %s294 = smul.addr %s27, 32
          %s295 = sadd.s32 %s290, %s294
          %s296 = smul.addr %s295, 64
          %s297 = scalar_lea.hbm %s3, %s296
          %s298 = sshll.u32 %s289, 4
          %s299 = int_to_ptr.vmem [resolvable:$true] %s298
          %304 = dma.hbm_to_vmem [thread:$0]  %s297, 1024, %s299, %s286, 64, 64, 4
        $region36: #{tpu_custom_call.1} parent=23 // pred_fallthru
          _
      $region24: #{tpu_custom_call.1} parent=5 // pred_fallthru
        _
      %p305 = scmp.le.s32.totalorder 1, %s19
      %p306 = scmp.lt.s32.totalorder %s19, 5
      %p307 = pnand %p305, %p306
      %p308 = pneg %p307
      // Predicated region
      $region37: #{tpu_custom_call.1} parent=5 // pred_check
        _
      $region38: #{tpu_custom_call.1} parent=5 // pred_check_branch
        %310 = sbr.rel (%p307) target = $region40
      $region39: #{tpu_custom_call.1} parent=5 // pred_region
        %s311 = ssub.s32 %s19, 1
        // Predicated region
        $region41: #{tpu_custom_call.1} parent=39 // pred_check
          %p312 = pneg %p64
        $region42: #{tpu_custom_call.1} parent=39 // pred_check_branch
          %314 = sbr.rel (%p312) target = $region44
        $region43: #{tpu_custom_call.1} parent=39 // pred_region
          %315 = dma.done [#allocation5], 2048
        $region44: #{tpu_custom_call.1} parent=39 // pred_fallthru
          _
        %s316 = sand.u32 %s24, 1
        %s317 = scalar_lea.sflag [#allocation8], %s316
        %s318 = sand.u32 %s79, 1
        %s319 = smul.addr %s318, 64
        %s320 = scalar_lea.vmem [#allocation7], %s319
        // Predicated region
        $region45: #{tpu_custom_call.1} parent=39 // pred_check
          %p321 = pneg %p92
        $region46: #{tpu_custom_call.1} parent=39 // pred_check_branch
          %323 = sbr.rel (%p321) target = $region48
        $region47: #{tpu_custom_call.1} parent=39 // pred_region
          %324 = dma.done %s317, 1024
        $region48: #{tpu_custom_call.1} parent=39 // pred_fallthru
          _
        %s325 = sand.u32 %s24, 1
        %s326 = scalar_lea.sflag [#allocation8], %s325
        %s327 = sand.u32 %s107, 1
        %s328 = scalar_lea.vmem [#allocation9], %s327
        // Predicated region
        $region49: #{tpu_custom_call.1} parent=39 // pred_check
          %p329 = pneg %p120
        $region50: #{tpu_custom_call.1} parent=39 // pred_check_branch
          %331 = sbr.rel (%p329) target = $region52
        $region51: #{tpu_custom_call.1} parent=39 // pred_region
          %332 = dma.done %s326, 16
        $region52: #{tpu_custom_call.1} parent=39 // pred_fallthru
          _
        %s333 = sand.u32 %s24, 1
        %s334 = scalar_lea.sflag [#allocation11], %s333
        %s335 = sand.u32 %s135, 1
        %s336 = smul.addr %s335, 64
        %s337 = scalar_lea.vmem [#allocation10], %s336
        // Predicated region
        $region53: #{tpu_custom_call.1} parent=39 // pred_check
          %p338 = pneg %p148
        $region54: #{tpu_custom_call.1} parent=39 // pred_check_branch
          %340 = sbr.rel (%p338) target = $region56
        $region55: #{tpu_custom_call.1} parent=39 // pred_region
          %341 = dma.done %s334, 1024
        $region56: #{tpu_custom_call.1} parent=39 // pred_fallthru
          _
        // Predicated region
        $region57: #{tpu_custom_call.1} parent=39 // pred_check
          %p342 = pneg %p169
        $region58: #{tpu_custom_call.1} parent=39 // pred_check_branch
          %344 = sbr.rel (%p342) target = $region60
        $region59: #{tpu_custom_call.1} parent=39 // pred_region
          %345 = dma.done [#allocation11], 16
        $region60: #{tpu_custom_call.1} parent=39 // pred_fallthru
          _
        %p346 = pneg %p64
        %p347 = pneg %p61
        %s348 = sand.u32 %s24, 1
        %s349 = scalar_lea.sflag [#allocation8], %s348
        %s350 = sand.u32 %s79, 1
        %s351 = smul.addr %s350, 64
        %s352 = scalar_lea.vmem [#allocation7], %s351
        %p353 = pneg %p92
        %p354 = pneg %p89
        %s355 = sand.u32 %s24, 1
        %s356 = scalar_lea.sflag [#allocation8], %s355
        %s357 = sand.u32 %s107, 1
        %s358 = scalar_lea.vmem [#allocation9], %s357
        %p359 = pneg %p120
        %p360 = pneg %p117
        %s361 = sand.u32 %s24, 1
        %s362 = scalar_lea.sflag [#allocation11], %s361
        %s363 = sand.u32 %s135, 1
        %s364 = smul.addr %s363, 64
        %s365 = scalar_lea.vmem [#allocation10], %s364
        %p366 = pneg %p148
        %p367 = pneg %p145
        %p368 = pneg %p169
        %p369 = pneg %p166
        %p370 = pneg %p195
        %p371 = pneg %p192
        %s372 = smul.u32 16, %s29
        %s373 = smul.u32 16, %s31
        %s374 = smul.u32 16, %s29
        %p376 = scmp.eq.s32.totalorder %s30, 0
        %p377 = scmp.eq.s32.totalorder %s31, 0
        %p378 = pnand %p376, %p377
        %p379 = pneg %p378
        %p380 = scmp.eq.s32.totalorder %s30, 1
        %p381 = scmp.eq.s32.totalorder %s31, 1
        %p382 = pnand %p380, %p381
        %p383 = pneg %p382
        // Predicated region
        $region61: #{tpu_custom_call.1} parent=39 // pred_check
          _
        $region62: #{tpu_custom_call.1} parent=39 // pred_check_branch
          %385 = sbr.rel (%p378) target = $region64
        $region63: #{tpu_custom_call.1} parent=39 // pred_region
          %v386 = vld [vmem:[#allocation4] sm:$0xff]
          %v387 = vld [vmem:[#allocation4 + $0x8] sm:$0xff]
          %v388 = vld [vmem:[#allocation4 + $0x10] sm:$0xff]
          %v389 = vld [vmem:[#allocation4 + $0x18] sm:$0xff]
          %v390 = vld [vmem:[#allocation4 + $0x20] sm:$0xff]
          %v391 = vld [vmem:[#allocation4 + $0x28] sm:$0xff]
          %v392 = vld [vmem:[#allocation4 + $0x30] sm:$0xff]
          %v393 = vld [vmem:[#allocation4 + $0x38] sm:$0xff]
          %v394 = vld [vmem:[#allocation4 + $0x40] sm:$0xff]
          %v395 = vld [vmem:[#allocation4 + $0x48] sm:$0xff]
          %v396 = vld [vmem:[#allocation4 + $0x50] sm:$0xff]
          %v397 = vld [vmem:[#allocation4 + $0x58] sm:$0xff]
          %v398 = vld [vmem:[#allocation4 + $0x60] sm:$0xff]
          %v399 = vld [vmem:[#allocation4 + $0x68] sm:$0xff]
          %v400 = vld [vmem:[#allocation4 + $0x70] sm:$0xff]
          %v401 = vld [vmem:[#allocation4 + $0x78] sm:$0xff]
          %v402 = vpack.c.bf16 %v387, %v386
          %v403 = vpack.c.bf16 %v389, %v388
          %v404 = vpack.c.bf16 %v391, %v390
          %v405 = vpack.c.bf16 %v393, %v392
          %v406 = vpack.c.bf16 %v395, %v394
          %v407 = vpack.c.bf16 %v397, %v396
          %v408 = vpack.c.bf16 %v399, %v398
          %v409 = vpack.c.bf16 %v401, %v400
          %410 = vst [vmem:[#allocation3] sm:$0xff] %v402
          %411 = vst [vmem:[#allocation3 + $0x8] sm:$0xff] %v403
          %412 = vst [vmem:[#allocation3 + $0x10] sm:$0xff] %v404
          %413 = vst [vmem:[#allocation3 + $0x18] sm:$0xff] %v405
          %414 = vst [vmem:[#allocation3 + $0x20] sm:$0xff] %v406
          %415 = vst [vmem:[#allocation3 + $0x28] sm:$0xff] %v407
          %416 = vst [vmem:[#allocation3 + $0x30] sm:$0xff] %v408
          %417 = vst [vmem:[#allocation3 + $0x38] sm:$0xff] %v409
          %418 = vst [vmem:[#allocation2] sm:$0xff] 0.0
          %419 = vst [vmem:[#allocation2 + $0x8] sm:$0xff] 0.0
          %420 = vst [vmem:[#allocation2 + $0x10] sm:$0xff] 0.0
          %421 = vst [vmem:[#allocation2 + $0x18] sm:$0xff] 0.0
          %422 = vst [vmem:[#allocation2 + $0x20] sm:$0xff] 0.0
          %423 = vst [vmem:[#allocation2 + $0x28] sm:$0xff] 0.0
          %424 = vst [vmem:[#allocation2 + $0x30] sm:$0xff] 0.0
          %425 = vst [vmem:[#allocation2 + $0x38] sm:$0xff] 0.0
          %426 = vst [vmem:[#allocation2 + $0x40] sm:$0xff] 0.0
          %427 = vst [vmem:[#allocation2 + $0x48] sm:$0xff] 0.0
          %428 = vst [vmem:[#allocation2 + $0x50] sm:$0xff] 0.0
          %429 = vst [vmem:[#allocation2 + $0x58] sm:$0xff] 0.0
          %430 = vst [vmem:[#allocation2 + $0x60] sm:$0xff] 0.0
          %431 = vst [vmem:[#allocation2 + $0x68] sm:$0xff] 0.0
          %432 = vst [vmem:[#allocation2 + $0x70] sm:$0xff] 0.0
          %433 = vst [vmem:[#allocation2 + $0x78] sm:$0xff] 0.0
        $region64: #{tpu_custom_call.1} parent=39 // pred_fallthru
          _
        %v434 = vld [vmem:[#allocation3] sm:$0xff]
        %v435 = vld [vmem:[#allocation3 + $0x8] sm:$0xff]
        %v436 = vld [vmem:[#allocation3 + $0x10] sm:$0xff]
        %v437 = vld [vmem:[#allocation3 + $0x18] sm:$0xff]
        %v438 = vld [vmem:[#allocation3 + $0x20] sm:$0xff]
        %v439 = vld [vmem:[#allocation3 + $0x28] sm:$0xff]
        %v440 = vld [vmem:[#allocation3 + $0x30] sm:$0xff]
        %v441 = vld [vmem:[#allocation3 + $0x38] sm:$0xff]
        %v442 = vld [vmem:[%s320] sm:$0xf]
        %v443 = vld [vmem:[%s320 + $0x4] sm:$0xf]
        %v444 = vld [vmem:[%s320 + $0x8] sm:$0xf]
        %v445 = vld [vmem:[%s320 + $0xc] sm:$0xf]
        %v446 = vld [vmem:[%s320 + $0x10] sm:$0xf]
        %v447 = vld [vmem:[%s320 + $0x14] sm:$0xf]
        %v448 = vld [vmem:[%s320 + $0x18] sm:$0xf]
        %v449 = vld [vmem:[%s320 + $0x1c] sm:$0xf]
        %v450 = vld [vmem:[%s320 + $0x20] sm:$0xf]
        %v451 = vld [vmem:[%s320 + $0x24] sm:$0xf]
        %v452 = vld [vmem:[%s320 + $0x28] sm:$0xf]
        %v453 = vld [vmem:[%s320 + $0x2c] sm:$0xf]
        %v454 = vld [vmem:[%s320 + $0x30] sm:$0xf]
        %v455 = vld [vmem:[%s320 + $0x34] sm:$0xf]
        %v456 = vld [vmem:[%s320 + $0x38] sm:$0xf]
        %v457 = vld [vmem:[%s320 + $0x3c] sm:$0xf]
        %v458 = vld [vmem:[%s328] sm:$0x1]
        %v460 = vlaneseq
        %v461 = vshrl.u32 %v460, 7
        %v462 = vsub.s32 0, %v461
        %v463 = vrot.slane %v458, %v462
        %v481 = vunpack.c.l.b16 %v442
        %v482 = vunpack.c.l.b16 %v443
        %v483 = vunpack.c.l.b16 %v444
        %v484 = vunpack.c.l.b16 %v445
        %v485 = vunpack.c.l.b16 %v446
        %v486 = vunpack.c.l.b16 %v447
        %v487 = vunpack.c.l.b16 %v448
        %v488 = vunpack.c.l.b16 %v449
        %v489 = vunpack.c.l.b16 %v450
        %v490 = vunpack.c.l.b16 %v451
        %v491 = vunpack.c.l.b16 %v452
        %v492 = vunpack.c.l.b16 %v453
        %v493 = vunpack.c.l.b16 %v454
        %v494 = vunpack.c.l.b16 %v455
        %v495 = vunpack.c.l.b16 %v456
        %v496 = vunpack.c.l.b16 %v457
        %v497 = vpack.c.b16 %v482, %v481
        %v498 = vpack.c.b16 %v484, %v483
        %v499 = vpack.c.b16 %v486, %v485
        %v500 = vpack.c.b16 %v488, %v487
        %v501 = vpack.c.b16 %v490, %v489
        %v502 = vpack.c.b16 %v492, %v491
        %v503 = vpack.c.b16 %v494, %v493
        %v504 = vpack.c.b16 %v496, %v495
        %513 = vmatprep.subr.bf16.mxu0 0
        %514 = vmatpush1.bf16.msra.mxu0 %v497
        %515 = vmatprep.subr.bf16.mxu0 0
        %516 = vmatpush1.bf16.msra.mxu0 %v498
        %517 = vmatprep.subr.bf16.mxu0 0
        %518 = vmatpush1.bf16.msra.mxu0 %v499
        %519 = vmatprep.subr.bf16.mxu0 0
        %520 = vmatpush1.bf16.msra.mxu0 %v500
        %521 = vmatprep.subr.bf16.mxu0 0
        %522 = vmatpush1.bf16.msra.mxu0 %v501
        %523 = vmatprep.subr.bf16.mxu0 0
        %524 = vmatpush1.bf16.msra.mxu0 %v502
        %525 = vmatprep.subr.bf16.mxu0 0
        %526 = vmatpush1.bf16.msra.mxu0 %v503
        %527 = vmatprep.subr.bf16.mxu0 0
        %528 = vmatpush1.bf16.msra.mxu0 %v504
        %529 = vmatprep.subr.bf16.mxu0 0
        %530 = vmatpush1.bf16.msra.mxu0 0
        %531 = vmatprep.subr.bf16.mxu0 0
        %532 = vmatpush1.bf16.msra.mxu0 0
        %533 = vmatprep.subr.bf16.mxu0 0
        %534 = vmatpush1.bf16.msra.mxu0 0
        %535 = vmatprep.subr.bf16.mxu0 0
        %536 = vmatpush1.bf16.msra.mxu0 0
        %537 = vmatprep.subr.bf16.mxu0 0
        %538 = vmatpush1.bf16.msra.mxu0 0
        %539 = vmatprep.subr.bf16.mxu0 0
        %540 = vmatpush1.bf16.msra.mxu0 0
        %541 = vmatprep.subr.bf16.mxu0 0
        %542 = vmatpush1.bf16.msra.mxu0 0
        %543 = vmatprep.subr.bf16.mxu0 0
        %544 = vmatpush1.bf16.msra.mxu0 0
        %545 = vmatprep.mubr.bf16.mxu0 0
        %546 = vmatmul.mubr.bf16.gmra.mrb[0].mxu0 %v434
        %v547 = vpop.f32.mrb[0].mxu0
        %v548 = vadd.f32 %v463, %v547
        %v549 = vpop.f32.mrb[0].mxu0
        %v550 = vpop.f32.mrb[0].mxu0
        %v551 = vadd.f32 %v463, %v550
        %v552 = vpop.f32.mrb[0].mxu0
        %553 = vmatprep.mubr.bf16.mxu0 0
        %554 = vmatmul.mubr.bf16.gmra.mrb[0].mxu0 %v435
        %v555 = vpop.f32.mrb[0].mxu0
        %v556 = vadd.f32 %v463, %v555
        %v557 = vpop.f32.mrb[0].mxu0
        %v558 = vpop.f32.mrb[0].mxu0
        %v559 = vadd.f32 %v463, %v558
        %v560 = vpop.f32.mrb[0].mxu0
        %561 = vmatprep.mubr.bf16.mxu0 0
        %562 = vmatmul.mubr.bf16.gmra.mrb[0].mxu0 %v436
        %v563 = vpop.f32.mrb[0].mxu0
        %v564 = vadd.f32 %v463, %v563
        %v565 = vpop.f32.mrb[0].mxu0
        %v566 = vpop.f32.mrb[0].mxu0
        %v567 = vadd.f32 %v463, %v566
        %v568 = vpop.f32.mrb[0].mxu0
        %569 = vmatprep.mubr.bf16.mxu0 0
        %570 = vmatmul.mubr.bf16.gmra.mrb[0].mxu0 %v437
        %v571 = vpop.f32.mrb[0].mxu0
        %v572 = vadd.f32 %v463, %v571
        %v573 = vpop.f32.mrb[0].mxu0
        %v574 = vpop.f32.mrb[0].mxu0
        %v575 = vadd.f32 %v463, %v574
        %v576 = vpop.f32.mrb[0].mxu0
        %577 = vmatprep.mubr.bf16.mxu0 0
        %578 = vmatmul.mubr.bf16.gmra.mrb[0].mxu0 %v438
        %v579 = vpop.f32.mrb[0].mxu0
        %v580 = vadd.f32 %v463, %v579
        %v581 = vpop.f32.mrb[0].mxu0
        %v582 = vpop.f32.mrb[0].mxu0
        %v583 = vadd.f32 %v463, %v582
        %v584 = vpop.f32.mrb[0].mxu0
        %585 = vmatprep.mubr.bf16.mxu0 0
        %586 = vmatmul.mubr.bf16.gmra.mrb[0].mxu0 %v439
        %v587 = vpop.f32.mrb[0].mxu0
        %v588 = vadd.f32 %v463, %v587
        %v589 = vpop.f32.mrb[0].mxu0
        %v590 = vpop.f32.mrb[0].mxu0
        %v591 = vadd.f32 %v463, %v590
        %v592 = vpop.f32.mrb[0].mxu0
        %593 = vmatprep.mubr.bf16.mxu0 0
        %594 = vmatmul.mubr.bf16.gmra.mrb[0].mxu0 %v440
        %v595 = vpop.f32.mrb[0].mxu0
        %v596 = vadd.f32 %v463, %v595
        %v597 = vpop.f32.mrb[0].mxu0
        %v598 = vpop.f32.mrb[0].mxu0
        %v599 = vadd.f32 %v463, %v598
        %v600 = vpop.f32.mrb[0].mxu0
        %601 = vmatprep.mubr.bf16.mxu0 0
        %602 = vmatmul.mubr.bf16.gmra.mrb[0].mxu0 %v441
        %v603 = vpop.f32.mrb[0].mxu0
        %v604 = vadd.f32 %v463, %v603
        %v605 = vpop.f32.mrb[0].mxu0
        %v606 = vpop.f32.mrb[0].mxu0
        %v607 = vadd.f32 %v463, %v606
        %v608 = vpop.f32.mrb[0].mxu0
        %609 = vdwg.mxu0
        %v610 = vmul.f32 %v548, %v548
        %v611 = vmul.f32 %v551, %v551
        %v612 = vmul.f32 %v556, %v556
        %v613 = vmul.f32 %v559, %v559
        %v614 = vmul.f32 %v564, %v564
        %v615 = vmul.f32 %v567, %v567
        %v616 = vmul.f32 %v572, %v572
        %v617 = vmul.f32 %v575, %v575
        %v618 = vmul.f32 %v580, %v580
        %v619 = vmul.f32 %v583, %v583
        %v620 = vmul.f32 %v588, %v588
        %v621 = vmul.f32 %v591, %v591
        %v622 = vmul.f32 %v596, %v596
        %v623 = vmul.f32 %v599, %v599
        %v624 = vmul.f32 %v604, %v604
        %v625 = vmul.f32 %v607, %v607
        %v626 = vmul.f32 %v548, %v610
        %v627 = vmul.f32 %v551, %v611
        %v628 = vmul.f32 %v556, %v612
        %v629 = vmul.f32 %v559, %v613
        %v630 = vmul.f32 %v564, %v614
        %v631 = vmul.f32 %v567, %v615
        %v632 = vmul.f32 %v572, %v616
        %v633 = vmul.f32 %v575, %v617
        %v634 = vmul.f32 %v580, %v618
        %v635 = vmul.f32 %v583, %v619
        %v636 = vmul.f32 %v588, %v620
        %v637 = vmul.f32 %v591, %v621
        %v638 = vmul.f32 %v596, %v622
        %v639 = vmul.f32 %v599, %v623
        %v640 = vmul.f32 %v604, %v624
        %v641 = vmul.f32 %v607, %v625
        %v642 = vmul.f32 %v626, 0.044715
        %v643 = vmul.f32 %v627, 0.044715
        %v644 = vmul.f32 %v628, 0.044715
        %v645 = vmul.f32 %v629, 0.044715
        %v646 = vmul.f32 %v630, 0.044715
        %v647 = vmul.f32 %v631, 0.044715
        %v648 = vmul.f32 %v632, 0.044715
        %v649 = vmul.f32 %v633, 0.044715
        %v650 = vmul.f32 %v634, 0.044715
        %v651 = vmul.f32 %v635, 0.044715
        %v652 = vmul.f32 %v636, 0.044715
        %v653 = vmul.f32 %v637, 0.044715
        %v654 = vmul.f32 %v638, 0.044715
        %v655 = vmul.f32 %v639, 0.044715
        %v656 = vmul.f32 %v640, 0.044715
        %v657 = vmul.f32 %v641, 0.044715
        %v658 = vadd.f32 %v548, %v642
        %v659 = vadd.f32 %v551, %v643
        %v660 = vadd.f32 %v556, %v644
        %v661 = vadd.f32 %v559, %v645
        %v662 = vadd.f32 %v564, %v646
        %v663 = vadd.f32 %v567, %v647
        %v664 = vadd.f32 %v572, %v648
        %v665 = vadd.f32 %v575, %v649
        %v666 = vadd.f32 %v580, %v650
        %v667 = vadd.f32 %v583, %v651
        %v668 = vadd.f32 %v588, %v652
        %v669 = vadd.f32 %v591, %v653
        %v670 = vadd.f32 %v596, %v654
        %v671 = vadd.f32 %v599, %v655
        %v672 = vadd.f32 %v604, %v656
        %v673 = vadd.f32 %v607, %v657
        %v674 = vmul.f32 %v658, 0.7978846
        %v675 = vmul.f32 %v659, 0.7978846
        %v676 = vmul.f32 %v660, 0.7978846
        %v677 = vmul.f32 %v661, 0.7978846
        %v678 = vmul.f32 %v662, 0.7978846
        %v679 = vmul.f32 %v663, 0.7978846
        %v680 = vmul.f32 %v664, 0.7978846
        %v681 = vmul.f32 %v665, 0.7978846
        %v682 = vmul.f32 %v666, 0.7978846
        %v683 = vmul.f32 %v667, 0.7978846
        %v684 = vmul.f32 %v668, 0.7978846
        %v685 = vmul.f32 %v669, 0.7978846
        %v686 = vmul.f32 %v670, 0.7978846
        %v687 = vmul.f32 %v671, 0.7978846
        %v688 = vmul.f32 %v672, 0.7978846
        %v689 = vmul.f32 %v673, 0.7978846
        %v690 = vtanh.pop %v674
        %v691 = vtanh.pop %v675
        %v692 = vtanh.pop %v676
        %v693 = vtanh.pop %v677
        %v694 = vtanh.pop %v678
        %v695 = vtanh.pop %v679
        %v696 = vtanh.pop %v680
        %v697 = vtanh.pop %v681
        %v698 = vtanh.pop %v682
        %v699 = vtanh.pop %v683
        %v700 = vtanh.pop %v684
        %v701 = vtanh.pop %v685
        %v702 = vtanh.pop %v686
        %v703 = vtanh.pop %v687
        %v704 = vtanh.pop %v688
        %v705 = vtanh.pop %v689
        %v706 = vadd.f32 %v690, 1.0
        %v707 = vadd.f32 %v691, 1.0
        %v708 = vadd.f32 %v692, 1.0
        %v709 = vadd.f32 %v693, 1.0
        %v710 = vadd.f32 %v694, 1.0
        %v711 = vadd.f32 %v695, 1.0
        %v712 = vadd.f32 %v696, 1.0
        %v713 = vadd.f32 %v697, 1.0
        %v714 = vadd.f32 %v698, 1.0
        %v715 = vadd.f32 %v699, 1.0
        %v716 = vadd.f32 %v700, 1.0
        %v717 = vadd.f32 %v701, 1.0
        %v718 = vadd.f32 %v702, 1.0
        %v719 = vadd.f32 %v703, 1.0
        %v720 = vadd.f32 %v704, 1.0
        %v721 = vadd.f32 %v705, 1.0
        %v722 = vmul.f32 %v706, 0.5
        %v723 = vmul.f32 %v707, 0.5
        %v724 = vmul.f32 %v708, 0.5
        %v725 = vmul.f32 %v709, 0.5
        %v726 = vmul.f32 %v710, 0.5
        %v727 = vmul.f32 %v711, 0.5
        %v728 = vmul.f32 %v712, 0.5
        %v729 = vmul.f32 %v713, 0.5
        %v730 = vmul.f32 %v714, 0.5
        %v731 = vmul.f32 %v715, 0.5
        %v732 = vmul.f32 %v716, 0.5
        %v733 = vmul.f32 %v717, 0.5
        %v734 = vmul.f32 %v718, 0.5
        %v735 = vmul.f32 %v719, 0.5
        %v736 = vmul.f32 %v720, 0.5
        %v737 = vmul.f32 %v721, 0.5
        %v738 = vmul.f32 %v548, %v722
        %v739 = vmul.f32 %v551, %v723
        %v740 = vmul.f32 %v556, %v724
        %v741 = vmul.f32 %v559, %v725
        %v742 = vmul.f32 %v564, %v726
        %v743 = vmul.f32 %v567, %v727
        %v744 = vmul.f32 %v572, %v728
        %v745 = vmul.f32 %v575, %v729
        %v746 = vmul.f32 %v580, %v730
        %v747 = vmul.f32 %v583, %v731
        %v748 = vmul.f32 %v588, %v732
        %v749 = vmul.f32 %v591, %v733
        %v750 = vmul.f32 %v596, %v734
        %v751 = vmul.f32 %v599, %v735
        %v752 = vmul.f32 %v604, %v736
        %v753 = vmul.f32 %v607, %v737
        %v754 = vpack.c.bf16 %v739, %v738
        %v755 = vpack.c.bf16 %v741, %v740
        %v756 = vpack.c.bf16 %v743, %v742
        %v757 = vpack.c.bf16 %v745, %v744
        %v758 = vpack.c.bf16 %v747, %v746
        %v759 = vpack.c.bf16 %v749, %v748
        %v760 = vpack.c.bf16 %v751, %v750
        %v761 = vpack.c.bf16 %v753, %v752
        %v762 = vld [vmem:[%s337] sm:$0xf]
        %v763 = vld [vmem:[%s337 + $0x4] sm:$0xf]
        %v764 = vld [vmem:[%s337 + $0x8] sm:$0xf]
        %v765 = vld [vmem:[%s337 + $0xc] sm:$0xf]
        %v766 = vld [vmem:[%s337 + $0x10] sm:$0xf]
        %v767 = vld [vmem:[%s337 + $0x14] sm:$0xf]
        %v768 = vld [vmem:[%s337 + $0x18] sm:$0xf]
        %v769 = vld [vmem:[%s337 + $0x1c] sm:$0xf]
        %v770 = vld [vmem:[%s337 + $0x20] sm:$0xf]
        %v771 = vld [vmem:[%s337 + $0x24] sm:$0xf]
        %v772 = vld [vmem:[%s337 + $0x28] sm:$0xf]
        %v773 = vld [vmem:[%s337 + $0x2c] sm:$0xf]
        %v774 = vld [vmem:[%s337 + $0x30] sm:$0xf]
        %v775 = vld [vmem:[%s337 + $0x34] sm:$0xf]
        %v776 = vld [vmem:[%s337 + $0x38] sm:$0xf]
        %v777 = vld [vmem:[%s337 + $0x3c] sm:$0xf]
        %v794 = vunpack.c.l.b16 %v762
        %v795 = vunpack.c.l.b16 %v763
        %v796 = vunpack.c.l.b16 %v764
        %v797 = vunpack.c.l.b16 %v765
        %v798 = vunpack.c.l.b16 %v766
        %v799 = vunpack.c.l.b16 %v767
        %v800 = vunpack.c.l.b16 %v768
        %v801 = vunpack.c.l.b16 %v769
        %v802 = vunpack.c.l.b16 %v770
        %v803 = vunpack.c.l.b16 %v771
        %v804 = vunpack.c.l.b16 %v772
        %v805 = vunpack.c.l.b16 %v773
        %v806 = vunpack.c.l.b16 %v774
        %v807 = vunpack.c.l.b16 %v775
        %v808 = vunpack.c.l.b16 %v776
        %v809 = vunpack.c.l.b16 %v777
        %v810 = vpack.c.b16 %v795, %v794
        %v811 = vpack.c.b16 %v797, %v796
        %v812 = vpack.c.b16 %v799, %v798
        %v813 = vpack.c.b16 %v801, %v800
        %v814 = vpack.c.b16 %v803, %v802
        %v815 = vpack.c.b16 %v805, %v804
        %v816 = vpack.c.b16 %v807, %v806
        %v817 = vpack.c.b16 %v809, %v808
        %826 = vmatprep.subr.bf16.mxu0 0
        %827 = vmatpush1.bf16.msra.mxu0 %v810
        %828 = vmatprep.subr.bf16.mxu0 0
        %829 = vmatpush1.bf16.msra.mxu0 %v811
        %830 = vmatprep.subr.bf16.mxu0 0
        %831 = vmatpush1.bf16.msra.mxu0 %v812
        %832 = vmatprep.subr.bf16.mxu0 0
        %833 = vmatpush1.bf16.msra.mxu0 %v813
        %834 = vmatprep.subr.bf16.mxu0 0
        %835 = vmatpush1.bf16.msra.mxu0 %v814
        %836 = vmatprep.subr.bf16.mxu0 0
        %837 = vmatpush1.bf16.msra.mxu0 %v815
        %838 = vmatprep.subr.bf16.mxu0 0
        %839 = vmatpush1.bf16.msra.mxu0 %v816
        %840 = vmatprep.subr.bf16.mxu0 0
        %841 = vmatpush1.bf16.msra.mxu0 %v817
        %842 = vmatprep.subr.bf16.mxu0 0
        %843 = vmatpush1.bf16.msra.mxu0 0
        %844 = vmatprep.subr.bf16.mxu0 0
        %845 = vmatpush1.bf16.msra.mxu0 0
        %846 = vmatprep.subr.bf16.mxu0 0
        %847 = vmatpush1.bf16.msra.mxu0 0
        %848 = vmatprep.subr.bf16.mxu0 0
        %849 = vmatpush1.bf16.msra.mxu0 0
        %850 = vmatprep.subr.bf16.mxu0 0
        %851 = vmatpush1.bf16.msra.mxu0 0
        %852 = vmatprep.subr.bf16.mxu0 0
        %853 = vmatpush1.bf16.msra.mxu0 0
        %854 = vmatprep.subr.bf16.mxu0 0
        %855 = vmatpush1.bf16.msra.mxu0 0
        %856 = vmatprep.subr.bf16.mxu0 0
        %857 = vmatpush1.bf16.msra.mxu0 0
        %858 = vmatprep.mubr.bf16.mxu0 0
        %859 = vmatmul.mubr.bf16.gmra.mrb[0].mxu0 %v754
        %v860 = vpop.f32.mrb[0].mxu0
        %v861 = vadd.f32 0.0, %v860
        %v862 = vpop.f32.mrb[0].mxu0
        %v863 = vpop.f32.mrb[0].mxu0
        %v864 = vadd.f32 0.0, %v863
        %v865 = vpop.f32.mrb[0].mxu0
        %866 = vmatprep.mubr.bf16.mxu0 0
        %867 = vmatmul.mubr.bf16.gmra.mrb[0].mxu0 %v755
        %v868 = vpop.f32.mrb[0].mxu0
        %v869 = vadd.f32 0.0, %v868
        %v870 = vpop.f32.mrb[0].mxu0
        %v871 = vpop.f32.mrb[0].mxu0
        %v872 = vadd.f32 0.0, %v871
        %v873 = vpop.f32.mrb[0].mxu0
        %874 = vmatprep.mubr.bf16.mxu0 0
        %875 = vmatmul.mubr.bf16.gmra.mrb[0].mxu0 %v756
        %v876 = vpop.f32.mrb[0].mxu0
        %v877 = vadd.f32 0.0, %v876
        %v878 = vpop.f32.mrb[0].mxu0
        %v879 = vpop.f32.mrb[0].mxu0
        %v880 = vadd.f32 0.0, %v879
        %v881 = vpop.f32.mrb[0].mxu0
        %882 = vmatprep.mubr.bf16.mxu0 0
        %883 = vmatmul.mubr.bf16.gmra.mrb[0].mxu0 %v757
        %v884 = vpop.f32.mrb[0].mxu0
        %v885 = vadd.f32 0.0, %v884
        %v886 = vpop.f32.mrb[0].mxu0
        %v887 = vpop.f32.mrb[0].mxu0
        %v888 = vadd.f32 0.0, %v887
        %v889 = vpop.f32.mrb[0].mxu0
        %890 = vmatprep.mubr.bf16.mxu0 0
        %891 = vmatmul.mubr.bf16.gmra.mrb[0].mxu0 %v758
        %v892 = vpop.f32.mrb[0].mxu0
        %v893 = vadd.f32 0.0, %v892
        %v894 = vpop.f32.mrb[0].mxu0
        %v895 = vpop.f32.mrb[0].mxu0
        %v896 = vadd.f32 0.0, %v895
        %v897 = vpop.f32.mrb[0].mxu0
        %898 = vmatprep.mubr.bf16.mxu0 0
        %899 = vmatmul.mubr.bf16.gmra.mrb[0].mxu0 %v759
        %v900 = vpop.f32.mrb[0].mxu0
        %v901 = vadd.f32 0.0, %v900
        %v902 = vpop.f32.mrb[0].mxu0
        %v903 = vpop.f32.mrb[0].mxu0
        %v904 = vadd.f32 0.0, %v903
        %v905 = vpop.f32.mrb[0].mxu0
        %906 = vmatprep.mubr.bf16.mxu0 0
        %907 = vmatmul.mubr.bf16.gmra.mrb[0].mxu0 %v760
        %v908 = vpop.f32.mrb[0].mxu0
        %v909 = vadd.f32 0.0, %v908
        %v910 = vpop.f32.mrb[0].mxu0
        %v911 = vpop.f32.mrb[0].mxu0
        %v912 = vadd.f32 0.0, %v911
        %v913 = vpop.f32.mrb[0].mxu0
        %914 = vmatprep.mubr.bf16.mxu0 0
        %915 = vmatmul.mubr.bf16.gmra.mrb[0].mxu0 %v761
        %v916 = vpop.f32.mrb[0].mxu0
        %v917 = vadd.f32 0.0, %v916
        %v918 = vpop.f32.mrb[0].mxu0
        %v919 = vpop.f32.mrb[0].mxu0
        %v920 = vadd.f32 0.0, %v919
        %v921 = vpop.f32.mrb[0].mxu0
        %922 = vdwg.mxu0
        %v923 = vld [vmem:[#allocation2] sm:$0xff]
        %v924 = vld [vmem:[#allocation2 + $0x8] sm:$0xff]
        %v925 = vld [vmem:[#allocation2 + $0x10] sm:$0xff]
        %v926 = vld [vmem:[#allocation2 + $0x18] sm:$0xff]
        %v927 = vld [vmem:[#allocation2 + $0x20] sm:$0xff]
        %v928 = vld [vmem:[#allocation2 + $0x28] sm:$0xff]
        %v929 = vld [vmem:[#allocation2 + $0x30] sm:$0xff]
        %v930 = vld [vmem:[#allocation2 + $0x38] sm:$0xff]
        %v931 = vld [vmem:[#allocation2 + $0x40] sm:$0xff]
        %v932 = vld [vmem:[#allocation2 + $0x48] sm:$0xff]
        %v933 = vld [vmem:[#allocation2 + $0x50] sm:$0xff]
        %v934 = vld [vmem:[#allocation2 + $0x58] sm:$0xff]
        %v935 = vld [vmem:[#allocation2 + $0x60] sm:$0xff]
        %v936 = vld [vmem:[#allocation2 + $0x68] sm:$0xff]
        %v937 = vld [vmem:[#allocation2 + $0x70] sm:$0xff]
        %v938 = vld [vmem:[#allocation2 + $0x78] sm:$0xff]
        %v939 = vadd.f32 %v923, %v861
        %v940 = vadd.f32 %v924, %v864
        %v941 = vadd.f32 %v925, %v869
        %v942 = vadd.f32 %v926, %v872
        %v943 = vadd.f32 %v927, %v877
        %v944 = vadd.f32 %v928, %v880
        %v945 = vadd.f32 %v929, %v885
        %v946 = vadd.f32 %v930, %v888
        %v947 = vadd.f32 %v931, %v893
        %v948 = vadd.f32 %v932, %v896
        %v949 = vadd.f32 %v933, %v901
        %v950 = vadd.f32 %v934, %v904
        %v951 = vadd.f32 %v935, %v909
        %v952 = vadd.f32 %v936, %v912
        %v953 = vadd.f32 %v937, %v917
        %v954 = vadd.f32 %v938, %v920
        %955 = vst [vmem:[#allocation2] sm:$0xff] %v939
        %956 = vst [vmem:[#allocation2 + $0x8] sm:$0xff] %v940
        %957 = vst [vmem:[#allocation2 + $0x10] sm:$0xff] %v941
        %958 = vst [vmem:[#allocation2 + $0x18] sm:$0xff] %v942
        %959 = vst [vmem:[#allocation2 + $0x20] sm:$0xff] %v943
        %960 = vst [vmem:[#allocation2 + $0x28] sm:$0xff] %v944
        %961 = vst [vmem:[#allocation2 + $0x30] sm:$0xff] %v945
        %962 = vst [vmem:[#allocation2 + $0x38] sm:$0xff] %v946
        %963 = vst [vmem:[#allocation2 + $0x40] sm:$0xff] %v947
        %964 = vst [vmem:[#allocation2 + $0x48] sm:$0xff] %v948
        %965 = vst [vmem:[#allocation2 + $0x50] sm:$0xff] %v949
        %966 = vst [vmem:[#allocation2 + $0x58] sm:$0xff] %v950
        %967 = vst [vmem:[#allocation2 + $0x60] sm:$0xff] %v951
        %968 = vst [vmem:[#allocation2 + $0x68] sm:$0xff] %v952
        %969 = vst [vmem:[#allocation2 + $0x70] sm:$0xff] %v953
        %970 = vst [vmem:[#allocation2 + $0x78] sm:$0xff] %v954
        // Predicated region
        $region65: #{tpu_custom_call.1} parent=39 // pred_check
          _
        $region66: #{tpu_custom_call.1} parent=39 // pred_check_branch
          %972 = sbr.rel (%p382) target = $region68
        $region67: #{tpu_custom_call.1} parent=39 // pred_region
          %v973 = vld [vmem:[#allocation2] sm:$0xff]
          %v974 = vld [vmem:[#allocation2 + $0x8] sm:$0xff]
          %v975 = vld [vmem:[#allocation2 + $0x10] sm:$0xff]
          %v976 = vld [vmem:[#allocation2 + $0x18] sm:$0xff]
          %v977 = vld [vmem:[#allocation2 + $0x20] sm:$0xff]
          %v978 = vld [vmem:[#allocation2 + $0x28] sm:$0xff]
          %v979 = vld [vmem:[#allocation2 + $0x30] sm:$0xff]
          %v980 = vld [vmem:[#allocation2 + $0x38] sm:$0xff]
          %v981 = vld [vmem:[#allocation2 + $0x40] sm:$0xff]
          %v982 = vld [vmem:[#allocation2 + $0x48] sm:$0xff]
          %v983 = vld [vmem:[#allocation2 + $0x50] sm:$0xff]
          %v984 = vld [vmem:[#allocation2 + $0x58] sm:$0xff]
          %v985 = vld [vmem:[#allocation2 + $0x60] sm:$0xff]
          %v986 = vld [vmem:[#allocation2 + $0x68] sm:$0xff]
          %v987 = vld [vmem:[#allocation2 + $0x70] sm:$0xff]
          %v988 = vld [vmem:[#allocation2 + $0x78] sm:$0xff]
          %v989 = vld [vmem:[#allocation12] sm:$0x1]
          %v991 = vlaneseq
          %v992 = vshrl.u32 %v991, 7
          %v993 = vsub.s32 0, %v992
          %v994 = vrot.slane %v989, %v993
          %v996 = vadd.f32 %v973, %v994
          %v997 = vadd.f32 %v974, %v994
          %v998 = vadd.f32 %v975, %v994
          %v999 = vadd.f32 %v976, %v994
          %v1000 = vadd.f32 %v977, %v994
          %v1001 = vadd.f32 %v978, %v994
          %v1002 = vadd.f32 %v979, %v994
          %v1003 = vadd.f32 %v980, %v994
          %v1004 = vadd.f32 %v981, %v994
          %v1005 = vadd.f32 %v982, %v994
          %v1006 = vadd.f32 %v983, %v994
          %v1007 = vadd.f32 %v984, %v994
          %v1008 = vadd.f32 %v985, %v994
          %v1009 = vadd.f32 %v986, %v994
          %v1010 = vadd.f32 %v987, %v994
          %v1011 = vadd.f32 %v988, %v994
          %1012 = vst [vmem:[#allocation13] sm:$0xff] %v996
          %1013 = vst [vmem:[#allocation13 + $0x8] sm:$0xff] %v997
          %1014 = vst [vmem:[#allocation13 + $0x10] sm:$0xff] %v998
          %1015 = vst [vmem:[#allocation13 + $0x18] sm:$0xff] %v999
          %1016 = vst [vmem:[#allocation13 + $0x20] sm:$0xff] %v1000
          %1017 = vst [vmem:[#allocation13 + $0x28] sm:$0xff] %v1001
          %1018 = vst [vmem:[#allocation13 + $0x30] sm:$0xff] %v1002
          %1019 = vst [vmem:[#allocation13 + $0x38] sm:$0xff] %v1003
          %1020 = vst [vmem:[#allocation13 + $0x40] sm:$0xff] %v1004
          %1021 = vst [vmem:[#allocation13 + $0x48] sm:$0xff] %v1005
          %1022 = vst [vmem:[#allocation13 + $0x50] sm:$0xff] %v1006
          %1023 = vst [vmem:[#allocation13 + $0x58] sm:$0xff] %v1007
          %1024 = vst [vmem:[#allocation13 + $0x60] sm:$0xff] %v1008
          %1025 = vst [vmem:[#allocation13 + $0x68] sm:$0xff] %v1009
          %1026 = vst [vmem:[#allocation13 + $0x70] sm:$0xff] %v1010
          %1027 = vst [vmem:[#allocation13 + $0x78] sm:$0xff] %v1011
        $region68: #{tpu_custom_call.1} parent=39 // pred_fallthru
          _
        // Predicated region
        $region69: #{tpu_custom_call.1} parent=39 // pred_check
          %p1028 = pneg %p192
        $region70: #{tpu_custom_call.1} parent=39 // pred_check_branch
          %1030 = sbr.rel (%p1028) target = $region72
        $region71: #{tpu_custom_call.1} parent=39 // pred_region
          %s1031 = smul.u32 16, %s29
          %s1033 = ssub.s32 2048, 2048
          %1034 = vsyncadd [#allocation6], %s1033
          %s1035 = smul.addr %s1031, 128
          %s1036 = scalar_lea.hbm %s5, %s1035
          %s1037 = sshll.u32 [#allocation13], 4
          %s1038 = int_to_ptr.vmem [resolvable:$true] %s1037
          %1043 = dma.vmem_to_hbm [thread:$0]  %s1038, 2048, %s1036, [#allocation6], 128, 128, 8
        $region72: #{tpu_custom_call.1} parent=39 // pred_fallthru
          _
        // Predicated region
        $region73: #{tpu_custom_call.1} parent=39 // pred_check
          %p1044 = pneg %p192
        $region74: #{tpu_custom_call.1} parent=39 // pred_check_branch
          %1046 = sbr.rel (%p1044) target = $region76
        $region75: #{tpu_custom_call.1} parent=39 // pred_region
          %1047 = dma.done [#allocation6], 2048
        $region76: #{tpu_custom_call.1} parent=39 // pred_fallthru
          _
      $region40: #{tpu_custom_call.1} parent=5 // pred_fallthru
        _
      %p1048 = scmp.le.s32.totalorder 2, %s19
      // Predicated region
      $region77: #{tpu_custom_call.1} parent=5 // pred_check
        %p1049 = pneg %p1048
      $region78: #{tpu_custom_call.1} parent=5 // pred_check_branch
        %1051 = sbr.rel (%p1049) target = $region80
      $region79: #{tpu_custom_call.1} parent=5 // pred_region
        %s1052 = ssub.s32 %s19, 2
      $region80: #{tpu_custom_call.1} parent=5 // pred_fallthru
        _
    $region6: #{tpu_custom_call.1} parent=1 // loop_footer
      %s23 = sadd.s32 1, %s19
    $region7: #{tpu_custom_call.1} parent=1 // loop_footer_branch
      %18 = sbr.rel target = $region3
    $region8: #{tpu_custom_call.1} parent=1 // loop_exit
      _
    %1053 = vsyncpa [#allocation5], 1
    %s1054 = scalar_lea.sflag [#allocation5], 1
    %1055 = vsyncpa %s1054, 1
    %1056 = vsyncpa [#allocation8], 1
    %s1057 = scalar_lea.sflag [#allocation8], 1
    %1058 = vsyncpa %s1057, 1
    %1059 = vsyncpa [#allocation11], 1
    %s1060 = scalar_lea.sflag [#allocation11], 1
    %1061 = vsyncpa %s1060, 1
    %1062 = vsyncpa [#allocation6], 1
    %s1063 = scalar_lea.sflag [#allocation6], 1
    %1064 = vsyncpa %s1063, 1

</llo_original>
